<compile_context>
chip_gen: v5e
topology: v5e:2x2
jax: 0.10.0
libtpu: 0.0.40
codegen_flags: <defaults>
</compile_context>

<pallas_src>
import functools
import math

import jax
import jax.numpy as jnp
from jax import lax
from jax.experimental import pallas as pl
from jax.experimental.pallas import tpu as pltpu


# ---------------------------------------------------------------------------
# Per-generation defaults (tiles / scoped-VMEM budget)
# ---------------------------------------------------------------------------

def _tpu_defaults():
    try:
        kind = jax.devices()[0].device_kind.lower()
    except Exception:
        kind = ""
    if "v7" in kind:                       # 64 MiB physical VMEM -> conservative
        return dict(vmem=44 * 2**20, row_tile=256, tq=128)
    if "v6" in kind:                       # 128 MiB physical VMEM
        return dict(vmem=96 * 2**20, row_tile=512, tq=256)
    if "v5 lite" in kind or "v5e" in kind or "v5lite" in kind:
        return dict(vmem=96 * 2**20, row_tile=512, tq=128)
    if "v2" in kind or "v3" in kind or "v4" in kind or "v5" in kind:
        return dict(vmem=64 * 2**20, row_tile=512, tq=128)
    return dict(vmem=44 * 2**20, row_tile=256, tq=128)   # unknown -> conservative


def _row_tiling(n, max_tile):
    tn = min(n, max_tile)
    return tn, pl.cdiv(n, tn)


def _const_spec(shape, index_map, single_buffer):
    # Weights / biases / LN params never change across the grid: request a single
    # VMEM buffer instead of the default double buffering.
    if single_buffer:
        return pl.BlockSpec(shape, index_map, pipeline_mode=pl.Buffered(1))
    return pl.BlockSpec(shape, index_map)


def _pick_f_chunk(f):
    if f <= 512:
        return f
    for c in (512, 256, 128):
        if f % c == 0:
            return c
    return f


# ---------------------------------------------------------------------------
# Kernels
# ---------------------------------------------------------------------------

def _qkv_kernel(x_ref, w_ref, b_ref, q_ref, k_ref, v_ref, *, d_model):
    # x: (TN, D) bf16; w: (D, 3D) bf16; b: (1, 3D) f32; outputs: (TN, D) bf16 each.
    y = jnp.dot(x_ref[...], w_ref[...], preferred_element_type=jnp.float32) + b_ref[...]
    yb = y.astype(jnp.bfloat16)
    q_ref[...] = yb[:, 0 * d_model:1 * d_model]
    k_ref[...] = yb[:, 1 * d_model:2 * d_model]
    v_ref[...] = yb[:, 2 * d_model:3 * d_model]


def _attn_proj_ln_kernel(*refs, n_heads, dh, scale, eps, has_mask, return_attn):
    # Inputs : q (1,TQ,D) bf16; k,v (1,L,D) bf16; x residual (1,TQ,D) f32;
    #          wo (D,D) bf16; bo/g/bln (1,D) f32; optional mask (TQ,L) f32 (additive).
    # Outputs: h1 (1,TQ,D) f32 = LayerNorm(x + heads@Wo + bo);
    #          optional attn (1,H,TQ,L) f32.
    it = iter(refs)
    q_ref, k_ref, v_ref, x_ref = next(it), next(it), next(it), next(it)
    wo_ref, bo_ref, g_ref, bln_ref = next(it), next(it), next(it), next(it)
    m_ref = next(it) if has_mask else None
    h1_ref = next(it)
    a_ref = next(it) if return_attn else None

    _, tq, d_model = h1_ref.shape
    # Fold the softmax scale into q once (one (TQ,D) mul instead of scaling scores).
    qt = q_ref[0] * scale                       # bf16 (weak-typed python float)
    kt = k_ref[0]                               # (L, D) bf16
    vt = v_ref[0]                               # (L, D) bf16
    mask = m_ref[...] if has_mask else None

    acc = jnp.zeros((tq, d_model), jnp.float32)
    for h in range(n_heads):                    # static unroll over heads
        lo, hi = h * dh, (h + 1) * dh
        # q @ k^T without materializing a transpose: contract on dh.
        s = lax.dot_general(qt[:, lo:hi], kt[:, lo:hi],
                            dimension_numbers=(((1,), (1,)), ((), ())),
                            preferred_element_type=jnp.float32)
        if has_mask:
            s = s + mask
        s = s - jnp.max(s, axis=-1, keepdims=True)
        e = jnp.exp(s)
        p = e * (1.0 / jnp.sum(e, axis=-1, keepdims=True))   # exact normalization
        if return_attn:
            a_ref[0, h] = p
        ctx = jnp.dot(p.astype(jnp.bfloat16), vt[:, lo:hi],
                      preferred_element_type=jnp.float32)      # (TQ, dh)
        # Fused output projection: concat(heads) @ Wo == sum_h ctx_h @ Wo[lo:hi, :]
        acc = acc + jnp.dot(ctx.astype(jnp.bfloat16), wo_ref[lo:hi, :],
                            preferred_element_type=jnp.float32)

    h = x_ref[0] + acc + bo_ref[...]            # residual add (f32)
    mu = jnp.mean(h, axis=-1, keepdims=True)
    var = jnp.mean((h - mu) ** 2, axis=-1, keepdims=True)
    h1_ref[0] = (h - mu) * lax.rsqrt(var + eps) * g_ref[...] + bln_ref[...]


def _ffn_add_ln_kernel(x_ref, w1_ref, b1_ref, w2_ref, b2_ref, g_ref, bln_ref, out_ref,
                       *, eps, f_chunk):
    # x: (TN, D) f32; w1: (D, F) bf16; w2: (F, D) bf16. Hidden dim chunked so the
    # live (TN, f_chunk) intermediate stays bounded.
    xb = x_ref[...].astype(jnp.bfloat16)
    tn, d = x_ref.shape
    f = w1_ref.shape[1]
    acc = jnp.zeros((tn, d), jnp.float32)
    for c in range(f // f_chunk):
        lo, hi = c * f_chunk, (c + 1) * f_chunk
        hid = (jnp.dot(xb, w1_ref[:, lo:hi], preferred_element_type=jnp.float32)
               + b1_ref[:, lo:hi])
        hid = jnp.maximum(hid, 0.0).astype(jnp.bfloat16)
        acc = acc + jnp.dot(hid, w2_ref[lo:hi, :], preferred_element_type=jnp.float32)
    h = x_ref[...] + acc + b2_ref[...]
    mu = jnp.mean(h, axis=-1, keepdims=True)
    var = jnp.mean((h - mu) ** 2, axis=-1, keepdims=True)
    out_ref[...] = (h - mu) * lax.rsqrt(var + eps) * g_ref[...] + bln_ref[...]


# ---------------------------------------------------------------------------
# Pallas wrappers (row-tiled, pipelined)
# ---------------------------------------------------------------------------

def qkv_projection(x2d_bf16, wqkv, bqkv, d_model, *, row_tile, vmem_limit, single_buffer):
    n, d = x2d_bf16.shape
    tn, steps = _row_tiling(n, row_tile)
    row = lambda i: (i, 0)
    const = lambda i: (0, 0)
    return pl.pallas_call(
        functools.partial(_qkv_kernel, d_model=d_model),
        grid=(steps,),
        in_specs=[
            pl.BlockSpec((tn, d), row),
            _const_spec(wqkv.shape, const, single_buffer),
            _const_spec(bqkv.shape, const, single_buffer),
        ],
        out_specs=tuple(pl.BlockSpec((tn, d_model), row) for _ in range(3)),
        out_shape=tuple(jax.ShapeDtypeStruct((n, d_model), jnp.bfloat16)
                        for _ in range(3)),
        compiler_params=pltpu.CompilerParams(
            dimension_semantics=("parallel",), vmem_limit_bytes=vmem_limit),
    )(x2d_bf16, wqkv, bqkv)


def attention_proj_layernorm(q, k, v, x_res, wo, bo, ln_g, ln_b, mask_add, *,
                             n_heads, scale, eps, tq, vmem_limit, single_buffer,
                             return_attn):
    # q, k, v: (B, L, D) bf16; x_res: (B, L, D) f32; mask_add: (L, L) f32 or None.
    B, L, D = q.shape
    dh = D // n_heads
    tq = min(tq, L)
    qsteps = pl.cdiv(L, tq)

    row3 = lambda b, qi: (b, qi, 0)
    kv_idx = lambda b, qi: (b, 0, 0)
    const2 = lambda b, qi: (0, 0)
    has_mask = mask_add is not None

    in_specs = [
        pl.BlockSpec((1, tq, D), row3),
        pl.BlockSpec((1, L, D), kv_idx),
        pl.BlockSpec((1, L, D), kv_idx),
        pl.BlockSpec((1, tq, D), row3),
        _const_spec(wo.shape, const2, single_buffer),
        _const_spec(bo.shape, const2, single_buffer),
        _const_spec(ln_g.shape, const2, single_buffer),
        _const_spec(ln_b.shape, const2, single_buffer),
    ]
    args = [q, k, v, x_res, wo, bo, ln_g, ln_b]
    if has_mask:
        in_specs.append(pl.BlockSpec((tq, L), lambda b, qi: (qi, 0)))
        args.append(mask_add)

    out_specs = [pl.BlockSpec((1, tq, D), row3)]
    out_shape = [jax.ShapeDtypeStruct((B, L, D), jnp.float32)]
    if return_attn:
        out_specs.append(pl.BlockSpec((1, n_heads, tq, L), lambda b, qi: (b, 0, qi, 0)))
        out_shape.append(jax.ShapeDtypeStruct((B, n_heads, L, L), jnp.float32))

    res = pl.pallas_call(
        functools.partial(_attn_proj_ln_kernel, n_heads=n_heads, dh=dh, scale=scale,
                          eps=eps, has_mask=has_mask, return_attn=return_attn),
        grid=(B, qsteps),
        in_specs=in_specs,
        out_specs=tuple(out_specs),
        out_shape=tuple(out_shape),
        compiler_params=pltpu.CompilerParams(
            # batch axis parallel, query-tile axis arbitrary -> a megacore split
            # lands on B and K/V residency is preserved per core.
            dimension_semantics=("parallel", "arbitrary"),
            vmem_limit_bytes=vmem_limit),
    )(*args)

    if return_attn:
        h1, attn = res
    else:
        (h1,) = res
        attn = None
    return h1, attn


def ffn_add_layernorm(x2d, w1, b1, w2, b2, gamma, beta, *, eps, row_tile, vmem_limit,
                      single_buffer):
    n, d = x2d.shape
    f = w1.shape[1]
    tn, steps = _row_tiling(n, row_tile)
    f_chunk = _pick_f_chunk(f)
    row = lambda i: (i, 0)
    const = lambda i: (0, 0)
    return pl.pallas_call(
        functools.partial(_ffn_add_ln_kernel, eps=eps, f_chunk=f_chunk),
        grid=(steps,),
        in_specs=[
            pl.BlockSpec((tn, d), row),
            _const_spec(w1.shape, const, single_buffer),
            _const_spec(b1.shape, const, single_buffer),
            _const_spec(w2.shape, const, single_buffer),
            _const_spec(b2.shape, const, single_buffer),
            _const_spec(gamma.shape, const, single_buffer),
            _const_spec(beta.shape, const, single_buffer),
        ],
        out_specs=pl.BlockSpec((tn, d), row),
        out_shape=jax.ShapeDtypeStruct((n, d), jnp.float32),
        compiler_params=pltpu.CompilerParams(
            dimension_semantics=("parallel",), vmem_limit_bytes=vmem_limit),
    )(x2d, w1, b1, w2, b2, gamma, beta)


# ---------------------------------------------------------------------------
# Parameters + forward (semantics of a concrete BaseEncoderLayer subclass)
# ---------------------------------------------------------------------------

def init_params(key, d_model, n_heads, d_ff):
    ks = jax.random.split(key, 6)
    s = 0.02
    wq = jax.random.normal(ks[0], (d_model, d_model), jnp.float32) * s
    wk = jax.random.normal(ks[1], (d_model, d_model), jnp.float32) * s
    wv = jax.random.normal(ks[2], (d_model, d_model), jnp.float32) * s
    return {
        "wqkv": jnp.concatenate([wq, wk, wv], axis=1).astype(jnp.bfloat16),
        "bqkv": jnp.zeros((1, 3 * d_model), jnp.float32),
        "wo": (jax.random.normal(ks[3], (d_model, d_model), jnp.float32) * s
               ).astype(jnp.bfloat16),
        "bo": jnp.zeros((1, d_model), jnp.float32),
        "w1": (jax.random.normal(ks[4], (d_model, d_ff), jnp.float32) * s
               ).astype(jnp.bfloat16),
        "b1": jnp.zeros((1, d_ff), jnp.float32),
        "w2": (jax.random.normal(ks[5], (d_ff, d_model), jnp.float32) * s
               ).astype(jnp.bfloat16),
        "b2": jnp.zeros((1, d_model), jnp.float32),
        "ln1_g": jnp.ones((1, d_model), jnp.float32),
        "ln1_b": jnp.zeros((1, d_model), jnp.float32),
        "ln2_g": jnp.ones((1, d_model), jnp.float32),
        "ln2_b": jnp.zeros((1, d_model), jnp.float32),
        "n_heads": n_heads,
    }


def _forward_impl(params, x, attn_mask, return_attn, single_buffer):
    B, L, D = x.shape
    H = params["n_heads"]
    assert D % H == 0
    dh = D // H
    scale = 1.0 / math.sqrt(dh)
    eps = 1e-5
    cfg = _tpu_defaults()

    xf = x.astype(jnp.float32)                       # f32 residual path
    x2d_bf16 = xf.reshape(B * L, D).astype(jnp.bfloat16)  # bf16 MXU stream

    # Fused QKV projection (one pass over x), outputs stay in (B, L, D) layout.
    q2d, k2d, v2d = qkv_projection(x2d_bf16, params["wqkv"], params["bqkv"], D,
                                   row_tile=cfg["row_tile"], vmem_limit=cfg["vmem"],
                                   single_buffer=single_buffer)
    q = q2d.reshape(B, L, D)
    k = k2d.reshape(B, L, D)
    v = v2d.reshape(B, L, D)

    mask_add = None
    if attn_mask is not None:
        mask_add = jnp.where(attn_mask, jnp.float32(-1e9), jnp.float32(0.0))

    # Query-tiled attention fused with out-projection + residual + LayerNorm1.
    h1, attn = attention_proj_layernorm(
        q, k, v, xf, params["wo"], params["bo"], params["ln1_g"], params["ln1_b"],
        mask_add, n_heads=H, scale=scale, eps=eps, tq=cfg["tq"],
        vmem_limit=cfg["vmem"], single_buffer=single_buffer, return_attn=return_attn)

    # FFN (F-chunked) + residual + LayerNorm2 fused.
    out2d = ffn_add_layernorm(h1.reshape(B * L, D), params["w1"], params["b1"],
                              params["w2"], params["b2"],
                              params["ln2_g"], params["ln2_b"],
                              eps=eps, row_tile=cfg["row_tile"],
                              vmem_limit=cfg["vmem"], single_buffer=single_buffer)

    return out2d.reshape(B, L, D), attn


def encoder_layer_forward(params, x, attn_mask=None, return_attn=True):
    """x: (B, L, D); attn_mask: optional (L, L) bool (True = masked).
    Returns (out (B, L, D) f32, attn (B, H, L, L) f32 or None)."""
    try:
        return _forward_impl(params, x, attn_mask, return_attn, single_buffer=True)
    except Exception:
        # TODO(synk): pl.Buffered(1) single-buffering of resident weights not accepted
        # by this jax build; fall back to default double-buffered constant blocks.
        return _forward_impl(params, x, attn_mask, return_attn, single_buffer=False)


if __name__ == "__main__":
    B, L, D, H, F = 2, 8, 32, 2, 64
    key = jax.random.PRNGKey(0)
    kx, kp = jax.random.split(key)
    x = jax.random.normal(kx, (B, L, D), jnp.float32)
    params = init_params(kp, D, H, F)

    # Path 1: no mask, attention weights returned (matches the ABC's Tuple return).
    out, attn = encoder_layer_forward(params, x, attn_mask=None, return_attn=True)
    jax.block_until_ready((out, attn))
    assert out.shape == (B, L, D) and attn.shape == (B, H, L, L)
    assert bool(jnp.all(jnp.isfinite(out))) and bool(jnp.all(jnp.isfinite(attn)))
    # exact normalization -> rows sum to 1 within f32 rounding
    assert bool(jnp.all(jnp.abs(jnp.sum(attn, axis=-1) - 1.0) < 1e-3))

    # Path 2: causal bool mask, attention weights skipped (big-L fast path).
    causal = jnp.triu(jnp.ones((L, L), dtype=bool), k=1)
    out2, attn2 = encoder_layer_forward(params, x, attn_mask=causal, return_attn=False)
    jax.block_until_ready(out2)
    assert out2.shape == (B, L, D) and attn2 is None
    assert bool(jnp.all(jnp.isfinite(out2)))

    print("KERNEL_OK")
</pallas_src>

<mosaic_0001>
module attributes {stable_mosaic.version = 11 : i64} {
  func.func @_qkv_kernel(%arg0: i32, %arg1: memref<16x32xbf16, #tpu.memory_space<vmem>>, %arg2: memref<32x96xbf16, #tpu.memory_space<vmem>>, %arg3: memref<1x96xf32, #tpu.memory_space<vmem>>, %arg4: memref<16x32xbf16, #tpu.memory_space<vmem>>, %arg5: memref<16x32xbf16, #tpu.memory_space<vmem>>, %arg6: memref<16x32xbf16, #tpu.memory_space<vmem>>) attributes {dimension_semantics = [#tpu.dimension_semantics<parallel>], iteration_bounds = array<i64: 1>, scalar_prefetch = 0 : i64, scratch_operands = 0 : i64, tpu.core_type = #tpu.core_type<tc>, window_params = [{transform_indices = @transform_0, window_bounds = array<i64: 16, 32>}, {pipeline_mode = #tpu.pipeline_mode<synchronous>, transform_indices = @transform_1, window_bounds = array<i64: 32, 96>}, {pipeline_mode = #tpu.pipeline_mode<synchronous>, transform_indices = @transform_2, window_bounds = array<i64: 1, 96>}, {transform_indices = @transform_3, window_bounds = array<i64: 16, 32>}, {transform_indices = @transform_4, window_bounds = array<i64: 16, 32>}, {transform_indices = @transform_5, window_bounds = array<i64: 16, 32>}]} {
    %c0 = arith.constant 0 : index
    %c0_0 = arith.constant 0 : index
    %0 = vector.load %arg1[%c0, %c0_0] : memref<16x32xbf16, #tpu.memory_space<vmem>>, vector<16x32xbf16>
    %c0_1 = arith.constant 0 : index
    %c0_2 = arith.constant 0 : index
    %1 = vector.load %arg2[%c0_1, %c0_2] : memref<32x96xbf16, #tpu.memory_space<vmem>>, vector<32x96xbf16>
    %cst = arith.constant dense<0.000000e+00> : vector<16x96xf32>
    %2 = tpu.matmul %0, %1, %cst {dimension_numbers = #tpu.dot_dimension_numbers<[1], [0], [0], [1], [0, 0, 1, 1], [], []>} : vector<16x32xbf16>, vector<32x96xbf16>, vector<16x96xf32> -> vector<16x96xf32>
    %c0_3 = arith.constant 0 : index
    %c0_4 = arith.constant 0 : index
    %3 = vector.load %arg3[%c0_3, %c0_4] : memref<1x96xf32, #tpu.memory_space<vmem>>, vector<1x96xf32>
    %4 = vector.broadcast %3 : vector<1x96xf32> to vector<16x96xf32>
    %5 = arith.addf %2, %4 : vector<16x96xf32>
    %6 = arith.truncf %5 : vector<16x96xf32> to vector<16x96xbf16>
    %7 = vector.extract_strided_slice %6 {offsets = [0, 0], sizes = [16, 32], strides = [1, 1]} : vector<16x96xbf16> to vector<16x32xbf16>
    %c0_5 = arith.constant 0 : index
    %c0_6 = arith.constant 0 : index
    %8 = vector.load %arg4[%c0_5, %c0_6] : memref<16x32xbf16, #tpu.memory_space<vmem>>, vector<16x32xbf16>
    tpu.vector_store %arg4[%c0_5, %c0_6], %7 {strides = array<i32>} : memref<16x32xbf16, #tpu.memory_space<vmem>>, vector<16x32xbf16>,
    %9 = vector.extract_strided_slice %6 {offsets = [0, 32], sizes = [16, 32], strides = [1, 1]} : vector<16x96xbf16> to vector<16x32xbf16>
    %c0_7 = arith.constant 0 : index
    %c0_8 = arith.constant 0 : index
    %10 = vector.load %arg5[%c0_7, %c0_8] : memref<16x32xbf16, #tpu.memory_space<vmem>>, vector<16x32xbf16>
    tpu.vector_store %arg5[%c0_7, %c0_8], %9 {strides = array<i32>} : memref<16x32xbf16, #tpu.memory_space<vmem>>, vector<16x32xbf16>,
    %11 = vector.extract_strided_slice %6 {offsets = [0, 64], sizes = [16, 32], strides = [1, 1]} : vector<16x96xbf16> to vector<16x32xbf16>
    %c0_9 = arith.constant 0 : index
    %c0_10 = arith.constant 0 : index
    %12 = vector.load %arg6[%c0_9, %c0_10] : memref<16x32xbf16, #tpu.memory_space<vmem>>, vector<16x32xbf16>
    tpu.vector_store %arg6[%c0_9, %c0_10], %11 {strides = array<i32>} : memref<16x32xbf16, #tpu.memory_space<vmem>>, vector<16x32xbf16>,
    return
  }
  func.func @transform_0(%arg0: i32) -> (i32, i32) {
    %c0_i32 = arith.constant 0 : i32
    %c0_i32_0 = arith.constant 0 : i32
    return %arg0, %c0_i32 : i32, i32
  }
  func.func @transform_1(%arg0: i32) -> (i32, i32) {
    %c0_i32 = arith.constant 0 : i32
    %c0_i32_0 = arith.constant 0 : i32
    %c0_i32_1 = arith.constant 0 : i32
    return %c0_i32, %c0_i32_0 : i32, i32
  }
  func.func @transform_2(%arg0: i32) -> (i32, i32) {
    %c0_i32 = arith.constant 0 : i32
    %c0_i32_0 = arith.constant 0 : i32
    %c0_i32_1 = arith.constant 0 : i32
    return %c0_i32, %c0_i32_0 : i32, i32
  }
  func.func @transform_3(%arg0: i32) -> (i32, i32) {
    %c0_i32 = arith.constant 0 : i32
    %c0_i32_0 = arith.constant 0 : i32
    return %arg0, %c0_i32 : i32, i32
  }
  func.func @transform_4(%arg0: i32) -> (i32, i32) {
    %c0_i32 = arith.constant 0 : i32
    %c0_i32_0 = arith.constant 0 : i32
    return %arg0, %c0_i32 : i32, i32
  }
  func.func @transform_5(%arg0: i32) -> (i32, i32) {
    %c0_i32 = arith.constant 0 : i32
    %c0_i32_0 = arith.constant 0 : i32
    return %arg0, %c0_i32 : i32, i32
  }
}

module attributes {stable_mosaic.version = 11 : i64} {
  func.func @_qkv_kernel(%arg0: i32, %arg1: memref<16x32xbf16, #tpu.memory_space<vmem>>, %arg2: memref<32x96xbf16, #tpu.memory_space<vmem>>, %arg3: memref<1x96xf32, #tpu.memory_space<vmem>>, %arg4: memref<16x32xbf16, #tpu.memory_space<vmem>>, %arg5: memref<16x32xbf16, #tpu.memory_space<vmem>>, %arg6: memref<16x32xbf16, #tpu.memory_space<vmem>>) attributes {dimension_semantics = [#tpu.dimension_semantics<parallel>], iteration_bounds = array<i64: 1>, scalar_prefetch = 0 : i64, scratch_operands = 0 : i64, tpu.core_type = #tpu.core_type<tc>, window_params = [{transform_indices = @transform_0, window_bounds = array<i64: 16, 32>}, {pipeline_mode = #tpu.pipeline_mode<synchronous>, transform_indices = @transform_1, window_bounds = array<i64: 32, 96>}, {pipeline_mode = #tpu.pipeline_mode<synchronous>, transform_indices = @transform_2, window_bounds = array<i64: 1, 96>}, {transform_indices = @transform_3, window_bounds = array<i64: 16, 32>}, {transform_indices = @transform_4, window_bounds = array<i64: 16, 32>}, {transform_indices = @transform_5, window_bounds = array<i64: 16, 32>}]} {
    %c0 = arith.constant 0 : index
    %c0_0 = arith.constant 0 : index
    %0 = vector.load %arg1[%c0, %c0_0] : memref<16x32xbf16, #tpu.memory_space<vmem>>, vector<16x32xbf16>
    %c0_1 = arith.constant 0 : index
    %c0_2 = arith.constant 0 : index
    %1 = vector.load %arg2[%c0_1, %c0_2] : memref<32x96xbf16, #tpu.memory_space<vmem>>, vector<32x96xbf16>
    %cst = arith.constant dense<0.000000e+00> : vector<16x96xf32>
    %2 = tpu.matmul %0, %1, %cst {dimension_numbers = #tpu.dot_dimension_numbers<[1], [0], [0], [1], [0, 0, 1, 1], [], []>} : vector<16x32xbf16>, vector<32x96xbf16>, vector<16x96xf32> -> vector<16x96xf32>
    %c0_3 = arith.constant 0 : index
    %c0_4 = arith.constant 0 : index
    %3 = vector.load %arg3[%c0_3, %c0_4] : memref<1x96xf32, #tpu.memory_space<vmem>>, vector<1x96xf32>
    %4 = vector.broadcast %3 : vector<1x96xf32> to vector<16x96xf32>
    %5 = arith.addf %2, %4 : vector<16x96xf32>
    %6 = arith.truncf %5 : vector<16x96xf32> to vector<16x96xbf16>
    %7 = vector.extract_strided_slice %6 {offsets = [0, 0], sizes = [16, 32], strides = [1, 1]} : vector<16x96xbf16> to vector<16x32xbf16>
    %c0_5 = arith.constant 0 : index
    %c0_6 = arith.constant 0 : index
    %8 = vector.load %arg4[%c0_5, %c0_6] : memref<16x32xbf16, #tpu.memory_space<vmem>>, vector<16x32xbf16>
    tpu.vector_store %arg4[%c0_5, %c0_6], %7 {strides = array<i32>} : memref<16x32xbf16, #tpu.memory_space<vmem>>, vector<16x32xbf16>,
    %9 = vector.extract_strided_slice %6 {offsets = [0, 32], sizes = [16, 32], strides = [1, 1]} : vector<16x96xbf16> to vector<16x32xbf16>
    %c0_7 = arith.constant 0 : index
    %c0_8 = arith.constant 0 : index
    %10 = vector.load %arg5[%c0_7, %c0_8] : memref<16x32xbf16, #tpu.memory_space<vmem>>, vector<16x32xbf16>
    tpu.vector_store %arg5[%c0_7, %c0_8], %9 {strides = array<i32>} : memref<16x32xbf16, #tpu.memory_space<vmem>>, vector<16x32xbf16>,
    %11 = vector.extract_strided_slice %6 {offsets = [0, 64], sizes = [16, 32], strides = [1, 1]} : vector<16x96xbf16> to vector<16x32xbf16>
    %c0_9 = arith.constant 0 : index
    %c0_10 = arith.constant 0 : index
    %12 = vector.load %arg6[%c0_9, %c0_10] : memref<16x32xbf16, #tpu.memory_space<vmem>>, vector<16x32xbf16>
    tpu.vector_store %arg6[%c0_9, %c0_10], %11 {strides = array<i32>} : memref<16x32xbf16, #tpu.memory_space<vmem>>, vector<16x32xbf16>,
    return
  }
  func.func @transform_0(%arg0: i32) -> (i32, i32) {
    %c0_i32 = arith.constant 0 : i32
    %c0_i32_0 = arith.constant 0 : i32
    return %arg0, %c0_i32 : i32, i32
  }
  func.func @transform_1(%arg0: i32) -> (i32, i32) {
    %c0_i32 = arith.constant 0 : i32
    %c0_i32_0 = arith.constant 0 : i32
    %c0_i32_1 = arith.constant 0 : i32
    return %c0_i32, %c0_i32_0 : i32, i32
  }
  func.func @transform_2(%arg0: i32) -> (i32, i32) {
    %c0_i32 = arith.constant 0 : i32
    %c0_i32_0 = arith.constant 0 : i32
    %c0_i32_1 = arith.constant 0 : i32
    return %c0_i32, %c0_i32_0 : i32, i32
  }
  func.func @transform_3(%arg0: i32) -> (i32, i32) {
    %c0_i32 = arith.constant 0 : i32
    %c0_i32_0 = arith.constant 0 : i32
    return %arg0, %c0_i32 : i32, i32
  }
  func.func @transform_4(%arg0: i32) -> (i32, i32) {
    %c0_i32 = arith.constant 0 : i32
    %c0_i32_0 = arith.constant 0 : i32
    return %arg0, %c0_i32 : i32, i32
  }
  func.func @transform_5(%arg0: i32) -> (i32, i32) {
    %c0_i32 = arith.constant 0 : i32
    %c0_i32_0 = arith.constant 0 : i32
    return %arg0, %c0_i32 : i32, i32
  }
}

</mosaic_0001>

<llo_original>
// kernel: tpu_custom_call.1
$region0: #{tpu_custom_call.1}
  #allocation0 [shape = 'u32[]', space=smem, size = 0x4, offset = 0x4, fixed_abs, tag = 'smem constant byte address 0x4 - core index']
  #allocation1 [shape = 'u32[72,128]{1,0:T(1,128)}', space=vmem, size = 0x9000, scoped, tag = 'internal scratch']
  %s0 = inlined_call_operand.hbm [shape: bf16[16,32], index: 0, kind: input, shape index: {}]
  %s1 = inlined_call_operand.hbm [shape: bf16[32,96], index: 1, kind: input, shape index: {}]
  %s2 = inlined_call_operand.vmem [shape: f32[1,96], index: 2, kind: input, shape index: {}]
  %s3 = inlined_call_operand.hbm [shape: bf16[16,32], index: 3, kind: output, shape index: {0}]
  %s4 = inlined_call_operand.hbm [shape: bf16[16,32], index: 4, kind: output, shape index: {1}]
  %s5 = inlined_call_operand.hbm [shape: bf16[16,32], index: 5, kind: output, shape index: {2}]
  %6 = xla_tuple %s3, %s4, %s5
  %s7 = sld [smem:[#allocation0]]
  $region46: #{tpu_custom_call.1} parent=0
    _
  %s9 = ssub.s32 1, %s7
  %s10 = scalar_select 0, %s9, %s7
  $region1: #{tpu_custom_call.1} parent=0
    #allocation2 [shape = 'u8[4096]{0}', space=vmem, size = 0x1000, scoped, tag = 'input window, operand 0, single buffered']
    #allocation3 [shape = 's32[1]{0}', space=sflag, size = 0x4, scoped, tag = 'scoped memory for tpu_custom_call.1']
    #allocation4 [shape = 's32[1]{0}', space=sflag, size = 0x4, scoped, tag = 'scoped memory for tpu_custom_call.1']
    #allocation5 [shape = 'u8[8192]{0}', space=vmem, size = 0x2000, scoped, tag = 'input window, operand 1, single buffered']
    #allocation6 [shape = 's32[1]{0}', space=sflag, size = 0x4, scoped, tag = 'scoped memory for tpu_custom_call.1']
    #allocation7 [shape = 'u8[4096]{0}', space=vmem, size = 0x1000, scoped, tag = 'output window, operand 0, single buffered']
    #allocation8 [shape = 'u8[4096]{0}', space=vmem, size = 0x1000, scoped, tag = 'output window, operand 1, single buffered']
    #allocation9 [shape = 's32[1]{0}', space=sflag, size = 0x4, scoped, tag = 'scoped memory for tpu_custom_call.1']
    #allocation10 [shape = 'u8[4096]{0}', space=vmem, size = 0x1000, scoped, tag = 'output window, operand 2, single buffered']
    %11 = vsyncpa [#allocation3], 0
    %12 = vsyncpa [#allocation6], 0
    %13 = vsyncpa [#allocation4], 0
    %14 = vsyncpa [#allocation9], 0
    // Predicated region
    $region2: #{tpu_custom_call.1} parent=1 // pred_check
      _
    $region3: #{tpu_custom_call.1} parent=1 // pred_check_branch
      %16 = sbr.rel (0) target = $region5
    $region4: #{tpu_custom_call.1} parent=1 // pred_region
      %18 = vsyncadd [#allocation3], 0
      %s19 = sshll.u32 %s0, 4
      %s20 = int_to_ptr.hbm [resolvable:$true] %s19
      %s21 = sshll.u32 [#allocation2], 4
      %s22 = int_to_ptr.vmem [resolvable:$true] %s21
      %27 = dma.hbm_to_vmem [thread:$0]  %s20, 128, %s22, [#allocation3], 64, 64, 4
    $region5: #{tpu_custom_call.1} parent=1 // pred_fallthru
      _
    // Predicated region
    $region6: #{tpu_custom_call.1} parent=1 // pred_check
      _
    $region7: #{tpu_custom_call.1} parent=1 // pred_check_branch
      %29 = sbr.rel (0) target = $region9
    $region8: #{tpu_custom_call.1} parent=1 // pred_region
      %31 = vsyncadd [#allocation6], 0
      %s32 = sshll.u32 %s1, 4
      %s33 = int_to_ptr.hbm [resolvable:$true] %s32
      %s34 = sshll.u32 [#allocation5], 4
      %s35 = int_to_ptr.vmem [resolvable:$true] %s34
      %40 = dma.hbm_to_vmem [thread:$0]  %s33, 256, %s35, [#allocation6], 64, 64, 4
    $region9: #{tpu_custom_call.1} parent=1 // pred_fallthru
      _
    // Predicated region
    $region10: #{tpu_custom_call.1} parent=1 // pred_check
      _
    $region11: #{tpu_custom_call.1} parent=1 // pred_check_branch
      %42 = sbr.rel (0) target = $region13
    $region12: #{tpu_custom_call.1} parent=1 // pred_region
      _
    $region13: #{tpu_custom_call.1} parent=1 // pred_fallthru
      _
    // Predicated region
    $region14: #{tpu_custom_call.1} parent=1 // pred_check
      _
    $region15: #{tpu_custom_call.1} parent=1 // pred_check_branch
      %44 = sbr.rel (0) target = $region17
    $region16: #{tpu_custom_call.1} parent=1 // pred_region
      %46 = dma.done [#allocation3], 128
    $region17: #{tpu_custom_call.1} parent=1 // pred_fallthru
      _
    // Predicated region
    $region18: #{tpu_custom_call.1} parent=1 // pred_check
      _
    $region19: #{tpu_custom_call.1} parent=1 // pred_check_branch
      %48 = sbr.rel (0) target = $region21
    $region20: #{tpu_custom_call.1} parent=1 // pred_region
      %50 = dma.done [#allocation6], 256
    $region21: #{tpu_custom_call.1} parent=1 // pred_fallthru
      _
    %v52 = vld [vmem:[#allocation2] sm:$0xf]
    %v53 = vld [vmem:[#allocation2 + $0x4] sm:$0xf]
    %v54 = vld [vmem:[#allocation5] sm:$0xf]
    %v55 = vld [vmem:[#allocation5 + $0x4] sm:$0xf]
    %v56 = vld [vmem:[#allocation5 + $0x8] sm:$0xf]
    %v57 = vld [vmem:[#allocation5 + $0xc] sm:$0xf]
    %v58 = vld [vmem:[%s2] sm:$0x1]
    %v60 = vperm.slane %v58, 0
    %v64 = vunpack.c.l.b16 %v52
    %v65 = vunpack.c.l.b16 %v53
    %v66 = vpack.c.b16 %v65, %v64
    %v71 = vunpack.c.l.b16 %v54
    %v72 = vunpack.c.l.b16 %v55
    %v73 = vunpack.c.l.b16 %v56
    %v74 = vunpack.c.l.b16 %v57
    %v75 = vpack.c.b16 %v72, %v71
    %v76 = vpack.c.b16 %v74, %v73
    %vm79 = vcmask 261120
    %v81 = vsel %vm79, %v66, 0
    %83 = vmatpush.bf16.msra.mxu0 0
    %84 = vmatpush.bf16.msra.mxu0 0
    %85 = vmatpush.bf16.msra.mxu0 0
    %86 = vmatpush.bf16.msra.mxu0 0
    %87 = vmatpush.bf16.msra.mxu0 0
    %88 = vmatpush.bf16.msra.mxu0 0
    %89 = vmatpush.bf16.msra.mxu0 %v76
    %90 = vmatpush.bf16.msra.mxu0 %v75
    %91 = vmatmul.bf16.gmra.mxu0 %v81
    %v92 = vpop.f32.mrf.mxu0
    %v93 = vadd.f32 %v60, %v92
    %v94 = vpop.f32.mrf.mxu0
    %v95 = vadd.f32 %v60, %v94
    %96 = vdwg.mxu0
    %v97 = vpack.c.bf16 %v93, %v93
    %v98 = vpack.c.bf16 %v95, %v95
    %vm99 = vcmask 257024
    %100 = vst.msk [vmem:[#allocation7] sm:$0xf] %vm99, %v97
    %101 = vst.msk [vmem:[#allocation7 + $0x4] sm:$0xf] %vm99, %v98
    %104 = vrot.lane.b32.xlu0 %v97, 96
    %v105 = vpop.permute.xlu0 %104
    %106 = vrot.lane.b32.xlu0 %v98, 96
    %v107 = vpop.permute.xlu0 %106
    %110 = vst.msk [vmem:[#allocation8] sm:$0xf] %vm99, %v105
    %111 = vst.msk [vmem:[#allocation8 + $0x4] sm:$0xf] %vm99, %v107
    %112 = vrot.lane.b32.xlu0 %v97, 64
    %v113 = vpop.permute.xlu0 %112
    %114 = vrot.lane.b32.xlu0 %v98, 64
    %v115 = vpop.permute.xlu0 %114
    %118 = vst.msk [vmem:[#allocation10] sm:$0xf] %vm99, %v113
    %119 = vst.msk [vmem:[#allocation10 + $0x4] sm:$0xf] %vm99, %v115
    // Predicated region
    $region22: #{tpu_custom_call.1} parent=1 // pred_check
      _
    $region23: #{tpu_custom_call.1} parent=1 // pred_check_branch
      %121 = sbr.rel (0) target = $region25
    $region24: #{tpu_custom_call.1} parent=1 // pred_region
      %123 = vsyncadd [#allocation4], 0
      %s124 = sshll.u32 [#allocation7], 4
      %s125 = int_to_ptr.vmem [resolvable:$true] %s124
      %s126 = sshll.u32 %s3, 4
      %s127 = int_to_ptr.hbm [resolvable:$true] %s126
      %132 = dma.vmem_to_hbm [thread:$0]  %s125, 128, %s127, [#allocation4], 64, 64, 4
    $region25: #{tpu_custom_call.1} parent=1 // pred_fallthru
      _
    // Predicated region
    $region26: #{tpu_custom_call.1} parent=1 // pred_check
      _
    $region27: #{tpu_custom_call.1} parent=1 // pred_check_branch
      %134 = sbr.rel (0) target = $region29
    $region28: #{tpu_custom_call.1} parent=1 // pred_region
      %136 = vsyncadd [#allocation9], 0
      %s137 = sshll.u32 [#allocation8], 4
      %s138 = int_to_ptr.vmem [resolvable:$true] %s137
      %s139 = sshll.u32 %s4, 4
      %s140 = int_to_ptr.hbm [resolvable:$true] %s139
      %145 = dma.vmem_to_hbm [thread:$0]  %s138, 128, %s140, [#allocation9], 64, 64, 4
    $region29: #{tpu_custom_call.1} parent=1 // pred_fallthru
      _
    // Predicated region
    $region30: #{tpu_custom_call.1} parent=1 // pred_check
      _
    $region31: #{tpu_custom_call.1} parent=1 // pred_check_branch
      %147 = sbr.rel (0) target = $region33
    $region32: #{tpu_custom_call.1} parent=1 // pred_region
      %149 = vsyncadd [#allocation9], 0
      %s150 = sshll.u32 [#allocation10], 4
      %s151 = int_to_ptr.vmem [resolvable:$true] %s150
      %s152 = sshll.u32 %s5, 4
      %s153 = int_to_ptr.hbm [resolvable:$true] %s152
      %158 = dma.vmem_to_hbm [thread:$0]  %s151, 128, %s153, [#allocation9], 64, 64, 4
    $region33: #{tpu_custom_call.1} parent=1 // pred_fallthru
      _
    // Predicated region
    $region34: #{tpu_custom_call.1} parent=1 // pred_check
      _
    $region35: #{tpu_custom_call.1} parent=1 // pred_check_branch
      %160 = sbr.rel (0) target = $region37
    $region36: #{tpu_custom_call.1} parent=1 // pred_region
      %162 = dma.done [#allocation4], 128
    $region37: #{tpu_custom_call.1} parent=1 // pred_fallthru
      _
    // Predicated region
    $region38: #{tpu_custom_call.1} parent=1 // pred_check
      _
    $region39: #{tpu_custom_call.1} parent=1 // pred_check_branch
      %164 = sbr.rel (0) target = $region41
    $region40: #{tpu_custom_call.1} parent=1 // pred_region
      %166 = dma.done [#allocation9], 128
    $region41: #{tpu_custom_call.1} parent=1 // pred_fallthru
      _
    // Predicated region
    $region42: #{tpu_custom_call.1} parent=1 // pred_check
      _
    $region43: #{tpu_custom_call.1} parent=1 // pred_check_branch
      %168 = sbr.rel (0) target = $region45
    $region44: #{tpu_custom_call.1} parent=1 // pred_region
      %170 = dma.done [#allocation9], 128
    $region45: #{tpu_custom_call.1} parent=1 // pred_fallthru
      _
    %171 = vsyncpa [#allocation3], 1
    %172 = vsyncpa [#allocation6], 1
    %173 = vsyncpa [#allocation4], 1
    %174 = vsyncpa [#allocation9], 1

// kernel: tpu_custom_call.1
$region0: #{tpu_custom_call.1}
  #allocation0 [shape = 'u32[]', space=smem, size = 0x4, offset = 0x4, fixed_abs, tag = 'smem constant byte address 0x4 - core index']
  #allocation1 [shape = 'u32[72,128]{1,0:T(1,128)}', space=vmem, size = 0x9000, scoped, tag = 'internal scratch']
  %s0 = inlined_call_operand.hbm [shape: bf16[16,32], index: 0, kind: input, shape index: {}]
  %s1 = inlined_call_operand.hbm [shape: bf16[32,96], index: 1, kind: input, shape index: {}]
  %s2 = inlined_call_operand.vmem [shape: f32[1,96], index: 2, kind: input, shape index: {}]
  %s3 = inlined_call_operand.hbm [shape: bf16[16,32], index: 3, kind: output, shape index: {0}]
  %s4 = inlined_call_operand.hbm [shape: bf16[16,32], index: 4, kind: output, shape index: {1}]
  %s5 = inlined_call_operand.hbm [shape: bf16[16,32], index: 5, kind: output, shape index: {2}]
  %6 = xla_tuple %s3, %s4, %s5
  %s7 = sld [smem:[#allocation0]]
  $region46: #{tpu_custom_call.1} parent=0
    _
  %s9 = ssub.s32 1, %s7
  %s10 = scalar_select 0, %s9, %s7
  $region1: #{tpu_custom_call.1} parent=0
    #allocation2 [shape = 'u8[4096]{0}', space=vmem, size = 0x1000, scoped, tag = 'input window, operand 0, single buffered']
    #allocation3 [shape = 's32[1]{0}', space=sflag, size = 0x4, scoped, tag = 'scoped memory for tpu_custom_call.1']
    #allocation4 [shape = 's32[1]{0}', space=sflag, size = 0x4, scoped, tag = 'scoped memory for tpu_custom_call.1']
    #allocation5 [shape = 'u8[8192]{0}', space=vmem, size = 0x2000, scoped, tag = 'input window, operand 1, single buffered']
    #allocation6 [shape = 's32[1]{0}', space=sflag, size = 0x4, scoped, tag = 'scoped memory for tpu_custom_call.1']
    #allocation7 [shape = 'u8[4096]{0}', space=vmem, size = 0x1000, scoped, tag = 'output window, operand 0, single buffered']
    #allocation8 [shape = 'u8[4096]{0}', space=vmem, size = 0x1000, scoped, tag = 'output window, operand 1, single buffered']
    #allocation9 [shape = 's32[1]{0}', space=sflag, size = 0x4, scoped, tag = 'scoped memory for tpu_custom_call.1']
    #allocation10 [shape = 'u8[4096]{0}', space=vmem, size = 0x1000, scoped, tag = 'output window, operand 2, single buffered']
    %11 = vsyncpa [#allocation3], 0
    %12 = vsyncpa [#allocation6], 0
    %13 = vsyncpa [#allocation4], 0
    %14 = vsyncpa [#allocation9], 0
    // Predicated region
    $region2: #{tpu_custom_call.1} parent=1 // pred_check
      _
    $region3: #{tpu_custom_call.1} parent=1 // pred_check_branch
      %16 = sbr.rel (0) target = $region5
    $region4: #{tpu_custom_call.1} parent=1 // pred_region
      %18 = vsyncadd [#allocation3], 0
      %s19 = sshll.u32 %s0, 4
      %s20 = int_to_ptr.hbm [resolvable:$true] %s19
      %s21 = sshll.u32 [#allocation2], 4
      %s22 = int_to_ptr.vmem [resolvable:$true] %s21
      %27 = dma.hbm_to_vmem [thread:$0]  %s20, 128, %s22, [#allocation3], 64, 64, 4
    $region5: #{tpu_custom_call.1} parent=1 // pred_fallthru
      _
    // Predicated region
    $region6: #{tpu_custom_call.1} parent=1 // pred_check
      _
    $region7: #{tpu_custom_call.1} parent=1 // pred_check_branch
      %29 = sbr.rel (0) target = $region9
    $region8: #{tpu_custom_call.1} parent=1 // pred_region
      %31 = vsyncadd [#allocation6], 0
      %s32 = sshll.u32 %s1, 4
      %s33 = int_to_ptr.hbm [resolvable:$true] %s32
      %s34 = sshll.u32 [#allocation5], 4
      %s35 = int_to_ptr.vmem [resolvable:$true] %s34
      %40 = dma.hbm_to_vmem [thread:$0]  %s33, 256, %s35, [#allocation6], 64, 64, 4
    $region9: #{tpu_custom_call.1} parent=1 // pred_fallthru
      _
    // Predicated region
    $region10: #{tpu_custom_call.1} parent=1 // pred_check
      _
    $region11: #{tpu_custom_call.1} parent=1 // pred_check_branch
      %42 = sbr.rel (0) target = $region13
    $region12: #{tpu_custom_call.1} parent=1 // pred_region
      _
    $region13: #{tpu_custom_call.1} parent=1 // pred_fallthru
      _
    // Predicated region
    $region14: #{tpu_custom_call.1} parent=1 // pred_check
      _
    $region15: #{tpu_custom_call.1} parent=1 // pred_check_branch
      %44 = sbr.rel (0) target = $region17
    $region16: #{tpu_custom_call.1} parent=1 // pred_region
      %46 = dma.done [#allocation3], 128
    $region17: #{tpu_custom_call.1} parent=1 // pred_fallthru
      _
    // Predicated region
    $region18: #{tpu_custom_call.1} parent=1 // pred_check
      _
    $region19: #{tpu_custom_call.1} parent=1 // pred_check_branch
      %48 = sbr.rel (0) target = $region21
    $region20: #{tpu_custom_call.1} parent=1 // pred_region
      %50 = dma.done [#allocation6], 256
    $region21: #{tpu_custom_call.1} parent=1 // pred_fallthru
      _
    %v52 = vld [vmem:[#allocation2] sm:$0xf]
    %v53 = vld [vmem:[#allocation2 + $0x4] sm:$0xf]
    %v54 = vld [vmem:[#allocation5] sm:$0xf]
    %v55 = vld [vmem:[#allocation5 + $0x4] sm:$0xf]
    %v56 = vld [vmem:[#allocation5 + $0x8] sm:$0xf]
    %v57 = vld [vmem:[#allocation5 + $0xc] sm:$0xf]
    %v58 = vld [vmem:[%s2] sm:$0x1]
    %v60 = vperm.slane %v58, 0
    %v64 = vunpack.c.l.b16 %v52
    %v65 = vunpack.c.l.b16 %v53
    %v66 = vpack.c.b16 %v65, %v64
    %v71 = vunpack.c.l.b16 %v54
    %v72 = vunpack.c.l.b16 %v55
    %v73 = vunpack.c.l.b16 %v56
    %v74 = vunpack.c.l.b16 %v57
    %v75 = vpack.c.b16 %v72, %v71
    %v76 = vpack.c.b16 %v74, %v73
    %vm79 = vcmask 261120
    %v81 = vsel %vm79, %v66, 0
    %83 = vmatpush.bf16.msra.mxu0 0
    %84 = vmatpush.bf16.msra.mxu0 0
    %85 = vmatpush.bf16.msra.mxu0 0
    %86 = vmatpush.bf16.msra.mxu0 0
    %87 = vmatpush.bf16.msra.mxu0 0
    %88 = vmatpush.bf16.msra.mxu0 0
    %89 = vmatpush.bf16.msra.mxu0 %v76
    %90 = vmatpush.bf16.msra.mxu0 %v75
    %91 = vmatmul.bf16.gmra.mxu0 %v81
    %v92 = vpop.f32.mrf.mxu0
    %v93 = vadd.f32 %v60, %v92
    %v94 = vpop.f32.mrf.mxu0
    %v95 = vadd.f32 %v60, %v94
    %96 = vdwg.mxu0
    %v97 = vpack.c.bf16 %v93, %v93
    %v98 = vpack.c.bf16 %v95, %v95
    %vm99 = vcmask 257024
    %100 = vst.msk [vmem:[#allocation7] sm:$0xf] %vm99, %v97
    %101 = vst.msk [vmem:[#allocation7 + $0x4] sm:$0xf] %vm99, %v98
    %104 = vrot.lane.b32.xlu0 %v97, 96
    %v105 = vpop.permute.xlu0 %104
    %106 = vrot.lane.b32.xlu0 %v98, 96
    %v107 = vpop.permute.xlu0 %106
    %110 = vst.msk [vmem:[#allocation8] sm:$0xf] %vm99, %v105
    %111 = vst.msk [vmem:[#allocation8 + $0x4] sm:$0xf] %vm99, %v107
    %112 = vrot.lane.b32.xlu0 %v97, 64
    %v113 = vpop.permute.xlu0 %112
    %114 = vrot.lane.b32.xlu0 %v98, 64
    %v115 = vpop.permute.xlu0 %114
    %118 = vst.msk [vmem:[#allocation10] sm:$0xf] %vm99, %v113
    %119 = vst.msk [vmem:[#allocation10 + $0x4] sm:$0xf] %vm99, %v115
    // Predicated region
    $region22: #{tpu_custom_call.1} parent=1 // pred_check
      _
    $region23: #{tpu_custom_call.1} parent=1 // pred_check_branch
      %121 = sbr.rel (0) target = $region25
    $region24: #{tpu_custom_call.1} parent=1 // pred_region
      %123 = vsyncadd [#allocation4], 0
      %s124 = sshll.u32 [#allocation7], 4
      %s125 = int_to_ptr.vmem [resolvable:$true] %s124
      %s126 = sshll.u32 %s3, 4
      %s127 = int_to_ptr.hbm [resolvable:$true] %s126
      %132 = dma.vmem_to_hbm [thread:$0]  %s125, 128, %s127, [#allocation4], 64, 64, 4
    $region25: #{tpu_custom_call.1} parent=1 // pred_fallthru
      _
    // Predicated region
    $region26: #{tpu_custom_call.1} parent=1 // pred_check
      _
    $region27: #{tpu_custom_call.1} parent=1 // pred_check_branch
      %134 = sbr.rel (0) target = $region29
    $region28: #{tpu_custom_call.1} parent=1 // pred_region
      %136 = vsyncadd [#allocation9], 0
      %s137 = sshll.u32 [#allocation8], 4
      %s138 = int_to_ptr.vmem [resolvable:$true] %s137
      %s139 = sshll.u32 %s4, 4
      %s140 = int_to_ptr.hbm [resolvable:$true] %s139
      %145 = dma.vmem_to_hbm [thread:$0]  %s138, 128, %s140, [#allocation9], 64, 64, 4
    $region29: #{tpu_custom_call.1} parent=1 // pred_fallthru
      _
    // Predicated region
    $region30: #{tpu_custom_call.1} parent=1 // pred_check
      _
    $region31: #{tpu_custom_call.1} parent=1 // pred_check_branch
      %147 = sbr.rel (0) target = $region33
    $region32: #{tpu_custom_call.1} parent=1 // pred_region
      %149 = vsyncadd [#allocation9], 0
      %s150 = sshll.u32 [#allocation10], 4
      %s151 = int_to_ptr.vmem [resolvable:$true] %s150
      %s152 = sshll.u32 %s5, 4
      %s153 = int_to_ptr.hbm [resolvable:$true] %s152
      %158 = dma.vmem_to_hbm [thread:$0]  %s151, 128, %s153, [#allocation9], 64, 64, 4
    $region33: #{tpu_custom_call.1} parent=1 // pred_fallthru
      _
    // Predicated region
    $region34: #{tpu_custom_call.1} parent=1 // pred_check
      _
    $region35: #{tpu_custom_call.1} parent=1 // pred_check_branch
      %160 = sbr.rel (0) target = $region37
    $region36: #{tpu_custom_call.1} parent=1 // pred_region
      %162 = dma.done [#allocation4], 128
    $region37: #{tpu_custom_call.1} parent=1 // pred_fallthru
      _
    // Predicated region
    $region38: #{tpu_custom_call.1} parent=1 // pred_check
      _
    $region39: #{tpu_custom_call.1} parent=1 // pred_check_branch
      %164 = sbr.rel (0) target = $region41
    $region40: #{tpu_custom_call.1} parent=1 // pred_region
      %166 = dma.done [#allocation9], 128
    $region41: #{tpu_custom_call.1} parent=1 // pred_fallthru
      _
    // Predicated region
    $region42: #{tpu_custom_call.1} parent=1 // pred_check
      _
    $region43: #{tpu_custom_call.1} parent=1 // pred_check_branch
      %168 = sbr.rel (0) target = $region45
    $region44: #{tpu_custom_call.1} parent=1 // pred_region
      %170 = dma.done [#allocation9], 128
    $region45: #{tpu_custom_call.1} parent=1 // pred_fallthru
      _
    %171 = vsyncpa [#allocation3], 1
    %172 = vsyncpa [#allocation6], 1
    %173 = vsyncpa [#allocation4], 1
    %174 = vsyncpa [#allocation9], 1

</llo_original>
